<compile_context>
chip_gen: v5e
topology: v5e:2x2
jax: 0.10.0
libtpu: 0.0.40
codegen_flags: <defaults>
</compile_context>

<pallas_src>
import jax
import jax.numpy as jnp
from jax.experimental import pallas as pl
from jax.experimental.pallas import tpu as pltpu


_LANE = 128


def _sublane(dtype):
    itemsize = jnp.dtype(dtype).itemsize
    return 8 * max(1, 4 // itemsize)       # 8 rows f32, 16 bf16, 32 int8


def _round_up(x, m):
    return ((x + m - 1) // m) * m


def _choose_row_tile(n_rows, f_in, n_props, f_out, dtype, budget_bytes=32 << 20):
    """Pick (row_tile, grid, padded_rows) from the *padded* VMEM footprint.

    Every stream is padded to 128 lanes / sublane-multiple rows and
    double-buffered; the budget keeps the total safely under v7x's 64 MiB/TC
    VMEM (and well under v5e/v6e's 128 MiB). The grid is rounded up to a
    multiple of 2 when it has more than one step so v7x's two TensorCores
    both get work.
    """
    sub = _sublane(dtype)
    itemsize = jnp.dtype(dtype).itemsize

    # Padded bytes contributed by one tile row across all streams, x2 buffers.
    padded_cols = _round_up(f_in, _LANE) + _round_up(f_out, _LANE)
    if n_props > 0:
        padded_cols += _round_up(n_props, _LANE)
    bytes_per_row = 2 * padded_cols * itemsize

    rt_cap = max(sub, (budget_bytes // bytes_per_row) // sub * sub)
    rows_ceil = _round_up(n_rows, sub)

    rt = min(rt_cap, rows_ceil)
    grid = pl.cdiv(n_rows, rt)
    if grid > 1 and grid % 2 == 1:
        grid += 1                                    # even grid for 2 TCs (v7x)
    rt = _round_up(pl.cdiv(n_rows, grid), sub)       # still <= rt_cap
    padded_rows = grid * rt
    return rt, grid, padded_rows


def _make_kernel(f_in, has_props, split_store):
    if not has_props:
        def kernel(rep_ref, out_ref):
            out_ref[...] = rep_ref[...]
        return kernel

    if split_store:
        def kernel(rep_ref, props_ref, out_ref):
            # F is a multiple of 128: bulk lane-dense unmasked store of the
            # representation, then one small masked store of the packed props.
            out_ref[:, 0:f_in] = rep_ref[...]
            out_ref[:, f_in:] = props_ref[...]
        return kernel

    def kernel(rep_ref, props_ref, out_ref):
        # One full-block store — no per-column partial writes.
        out_ref[...] = jnp.concatenate([rep_ref[...], props_ref[...]], axis=-1)
    return kernel


def add_to_representation(rep, props, additional_props):
    """Pallas implementation of AddToRepresentation.forward.

    rep:   (B, N, F) float array            (inputs['representation'])
    props: dict name -> (B,) or (B, N) array
    additional_props: list of names, concatenation order.
    Returns (B, N, F + len(additional_props)) array with rep's dtype.
    """
    B, N, F = rep.shape
    P = len(additional_props)
    out_dtype = rep.dtype
    F_out = F + P
    R = B * N

    # --- wrapper-side packing: flatten rows, broadcast dim-1 props, one slab ---
    rep_flat = rep.reshape(R, F)

    prop_cols = []
    for name in additional_props:
        x = props[name]
        if x.ndim == 1:
            assert x.shape == (B,), (name, x.shape)
            x = jnp.broadcast_to(x[:, None], (B, N))
        elif x.ndim == 2:
            assert x.shape == (B, N), (name, x.shape)
        else:
            raise ValueError(f"property {name} must have dim 1 or 2")
        prop_cols.append(x.astype(out_dtype).reshape(R))

    props_flat = jnp.stack(prop_cols, axis=-1) if P else None   # (R, P), in order

    # --- tiling from padded VMEM footprint ---
    rt, grid, r_pad = _choose_row_tile(R, F, P, F_out, out_dtype)

    if r_pad > R:
        pad = r_pad - R
        rep_flat = jnp.pad(rep_flat, ((0, pad), (0, 0)))
        if P:
            props_flat = jnp.pad(props_flat, ((0, pad), (0, 0)))

    kernel_inputs = [rep_flat]
    # Block last dims equal the full array dims (or are sublane multiples):
    # no (8,128) divisibility issues.
    in_specs = [pl.BlockSpec((rt, F), lambda i: (i, 0))]
    if P:
        kernel_inputs.append(props_flat)
        in_specs.append(pl.BlockSpec((rt, P), lambda i: (i, 0)))

    itemsize = jnp.dtype(out_dtype).itemsize
    cost = pl.CostEstimate(
        flops=0,
        transcendentals=0,
        bytes_accessed=(R * F + R * P + R * F_out) * itemsize)

    split_store = (P > 0) and (F % _LANE == 0)
    kernel = _make_kernel(F, P > 0, split_store)

    out_flat = pl.pallas_call(
        kernel,
        out_shape=jax.ShapeDtypeStruct((r_pad, F_out), out_dtype),
        grid=(grid,),
        in_specs=in_specs,
        out_specs=pl.BlockSpec((rt, F_out), lambda i: (i, 0)),
        compiler_params=pltpu.CompilerParams(
            dimension_semantics=("parallel",),
            vmem_limit_bytes=48 << 20),
        cost_estimate=cost,
    )(*kernel_inputs)

    return out_flat[:R].reshape(B, N, F_out)


def _reference(rep, props, additional_props):
    """Plain-JAX reference matching the PyTorch forward."""
    B, N, F = rep.shape
    out = [rep]
    for name in additional_props:
        x = props[name]
        if x.ndim == 1:
            x = jnp.broadcast_to(x[:, None], (B, N))[..., None]
        elif x.ndim == 2:
            x = x[..., None]
        out.append(x.astype(rep.dtype))
    return jnp.concatenate(out, axis=-1)


if __name__ == "__main__":
    key = jax.random.PRNGKey(0)

    # Case 1: small F (34-lane output -> single concat store path).
    k1, k2, k3, key = jax.random.split(key, 4)
    B, N, F = 2, 8, 32
    rep = jax.random.normal(k1, (B, N, F), dtype=jnp.float32)
    props = {
        "dielectric_constant": jax.random.normal(k2, (B,), dtype=jnp.float32),
        "atomic_charges": jax.random.normal(k3, (B, N), dtype=jnp.float32),
    }
    names = ["dielectric_constant", "atomic_charges"]
    out = jax.block_until_ready(add_to_representation(rep, props, names))
    exp = _reference(rep, props, names)
    assert out.shape == (B, N, F + len(names)) and out.dtype == rep.dtype
    assert jnp.allclose(out, exp, atol=1e-6, rtol=1e-6)

    # Case 2: F multiple of 128 (lane-dense split-store path) with row padding
    # (B*N not a multiple of 8) and mixed prop ordering.
    k1, k2, k3, k4, key = jax.random.split(key, 5)
    B2, N2, F2 = 3, 10, 128
    rep2 = jax.random.normal(k1, (B2, N2, F2), dtype=jnp.float32)
    props2 = {
        "charge_a": jax.random.normal(k2, (B2, N2), dtype=jnp.float32),
        "solvent_eps": jax.random.normal(k3, (B2,), dtype=jnp.float32),
        "charge_b": jax.random.normal(k4, (B2, N2), dtype=jnp.float32),
    }
    names2 = ["charge_a", "solvent_eps", "charge_b"]
    out2 = jax.block_until_ready(add_to_representation(rep2, props2, names2))
    exp2 = _reference(rep2, props2, names2)
    assert out2.shape == (B2, N2, F2 + len(names2)) and out2.dtype == rep2.dtype
    assert jnp.allclose(out2, exp2, atol=1e-6, rtol=1e-6)

    print("KERNEL_OK")
</pallas_src>

<mosaic_0001>
module attributes {stable_mosaic.version = 11 : i64} {
  func.func @kernel(%arg0: i32, %arg1: memref<16x32xf32, #tpu.memory_space<vmem>>, %arg2: memref<16x2xf32, #tpu.memory_space<vmem>>, %arg3: memref<16x34xf32, #tpu.memory_space<vmem>>) attributes {dimension_semantics = [#tpu.dimension_semantics<parallel>], iteration_bounds = array<i64: 1>, scalar_prefetch = 0 : i64, scratch_operands = 0 : i64, tpu.core_type = #tpu.core_type<tc>, window_params = [{transform_indices = @transform_0, window_bounds = array<i64: 16, 32>}, {transform_indices = @transform_1, window_bounds = array<i64: 16, 2>}, {transform_indices = @transform_2, window_bounds = array<i64: 16, 34>}]} {
    %c0 = arith.constant 0 : index
    %c0_0 = arith.constant 0 : index
    %0 = vector.load %arg1[%c0, %c0_0] : memref<16x32xf32, #tpu.memory_space<vmem>>, vector<16x32xf32>
    %c0_1 = arith.constant 0 : index
    %c0_2 = arith.constant 0 : index
    %1 = vector.load %arg2[%c0_1, %c0_2] : memref<16x2xf32, #tpu.memory_space<vmem>>, vector<16x2xf32>
    %2 = tpu.concatenate %0, %1 in 1 : vector<16x32xf32>, vector<16x2xf32> -> vector<16x34xf32>
    %c0_3 = arith.constant 0 : index
    %c0_4 = arith.constant 0 : index
    %3 = vector.load %arg3[%c0_3, %c0_4] : memref<16x34xf32, #tpu.memory_space<vmem>>, vector<16x34xf32>
    tpu.vector_store %arg3[%c0_3, %c0_4], %2 {strides = array<i32>} : memref<16x34xf32, #tpu.memory_space<vmem>>, vector<16x34xf32>,
    return
  }
  func.func @transform_0(%arg0: i32) -> (i32, i32) {
    %c0_i32 = arith.constant 0 : i32
    %c0_i32_0 = arith.constant 0 : i32
    return %arg0, %c0_i32 : i32, i32
  }
  func.func @transform_1(%arg0: i32) -> (i32, i32) {
    %c0_i32 = arith.constant 0 : i32
    %c0_i32_0 = arith.constant 0 : i32
    return %arg0, %c0_i32 : i32, i32
  }
  func.func @transform_2(%arg0: i32) -> (i32, i32) {
    %c0_i32 = arith.constant 0 : i32
    %c0_i32_0 = arith.constant 0 : i32
    return %arg0, %c0_i32 : i32, i32
  }
}

</mosaic_0001>

<llo_original>
// kernel: tpu_custom_call.1
$region0: #{tpu_custom_call.1}
  #allocation0 [shape = 'u32[]', space=smem, size = 0x4, offset = 0x4, fixed_abs, tag = 'smem constant byte address 0x4 - core index']
  #allocation1 [shape = 'u32[72,128]{1,0:T(1,128)}', space=vmem, size = 0x9000, scoped, tag = 'internal scratch']
  %s0 = inlined_call_operand.vmem [shape: f32[16,32], index: 0, kind: input, shape index: {}]
  %s1 = inlined_call_operand.vmem [shape: f32[16,2], index: 1, kind: input, shape index: {}]
  %s2 = inlined_call_operand.hbm [shape: f32[16,34], index: 2, kind: output, shape index: {}]
  %s3 = sld [smem:[#allocation0]]
  $region18: #{tpu_custom_call.1} parent=0
    _
  %s5 = ssub.s32 1, %s3
  %s6 = scalar_select 0, %s5, %s3
  $region1: #{tpu_custom_call.1} parent=0
    #allocation2 [shape = 'u8[8192]{0}', space=vmem, size = 0x2000, scoped, tag = 'output window, operand 0, single buffered']
    #allocation3 [shape = 's32[1]{0}', space=sflag, size = 0x4, scoped, tag = 'scoped memory for tpu_custom_call.1']
    %7 = vsyncpa [#allocation3], 0
    // Predicated region
    $region2: #{tpu_custom_call.1} parent=1 // pred_check
      _
    $region3: #{tpu_custom_call.1} parent=1 // pred_check_branch
      %9 = sbr.rel (0) target = $region5
    $region4: #{tpu_custom_call.1} parent=1 // pred_region
      _
    $region5: #{tpu_custom_call.1} parent=1 // pred_fallthru
      _
    // Predicated region
    $region6: #{tpu_custom_call.1} parent=1 // pred_check
      _
    $region7: #{tpu_custom_call.1} parent=1 // pred_check_branch
      %11 = sbr.rel (0) target = $region9
    $region8: #{tpu_custom_call.1} parent=1 // pred_region
      _
    $region9: #{tpu_custom_call.1} parent=1 // pred_fallthru
      _
    %v12 = vld [vmem:[%s0] sm:$0xff]
    %v13 = vld [vmem:[%s0 + $0x8] sm:$0xff]
    %v14 = vld [vmem:[%s1] sm:$0xff]
    %v15 = vld [vmem:[%s1 + $0x8] sm:$0xff]
    %18 = vrot.lane.b32.xlu0 %v14, 32
    %v19 = vpop.permute.xlu0 %18
    %20 = vrot.lane.b32.xlu0 %v15, 32
    %v21 = vpop.permute.xlu0 %20
    %vm24 = vcmask 261120
    %v25 = vsel %vm24, %v12, %v19
    %v26 = vsel %vm24, %v13, %v21
    %vm27 = vcmask 277504
    %28 = vst.msk [vmem:[#allocation2] sm:$0xff] %vm27, %v25
    %29 = vst.msk [vmem:[#allocation2 + $0x8] sm:$0xff] %vm27, %v26
    // Predicated region
    $region10: #{tpu_custom_call.1} parent=1 // pred_check
      _
    $region11: #{tpu_custom_call.1} parent=1 // pred_check_branch
      %31 = sbr.rel (0) target = $region13
    $region12: #{tpu_custom_call.1} parent=1 // pred_region
      %33 = vsyncadd [#allocation3], 0
      %s34 = sshll.u32 [#allocation2], 4
      %s35 = int_to_ptr.vmem [resolvable:$true] %s34
      %s36 = sshll.u32 %s2, 4
      %s37 = int_to_ptr.hbm [resolvable:$true] %s36
      %42 = dma.vmem_to_hbm [thread:$0]  %s35, 256, %s37, [#allocation3], 128, 128, 8
    $region13: #{tpu_custom_call.1} parent=1 // pred_fallthru
      _
    // Predicated region
    $region14: #{tpu_custom_call.1} parent=1 // pred_check
      _
    $region15: #{tpu_custom_call.1} parent=1 // pred_check_branch
      %44 = sbr.rel (0) target = $region17
    $region16: #{tpu_custom_call.1} parent=1 // pred_region
      %46 = dma.done [#allocation3], 256
    $region17: #{tpu_custom_call.1} parent=1 // pred_fallthru
      _
    %47 = vsyncpa [#allocation3], 1

</llo_original>
